<compile_context>
chip_gen: v5e
topology: v5e:2x2
jax: 0.10.0
libtpu: 0.0.40
codegen_flags: <defaults>
</compile_context>

<pallas_src>
import functools

import jax
import jax.numpy as jnp
from jax import lax
from jax.experimental import pallas as pl
from jax.experimental.pallas import tpu as pltpu

LANES = 128
SUBLANES = 8
CHUNK_ROWS = 64             # inner compute granularity: 64x128 f32 = 8 vregs/array
MAX_BLOCK_ROWS = 8192       # DMA granularity: 8192x128 f32 = 4 MiB per input per step
VMEM_LIMIT_BYTES = 32 * 1024 * 1024


def _cdiv(a, b):
    return -(-a // b)


def _round_up(a, b):
    return _cdiv(a, b) * b


def _focal_loss_kernel(x_ref, t_ref, out_ref, acc_ref, *, gamma, alpha, scale,
                       block_rows, chunk_rows, grid_blocks, rows_valid,
                       lane_rem, needs_mask):
    i = pl.program_id(0)

    @pl.when(i == 0)
    def _():
        acc_ref[...] = jnp.zeros_like(acc_ref)

    num_chunks = block_rows // chunk_rows

    def accumulate(masked):
        def chunk_body(c, carry):
            r0 = pl.multiple_of(c * chunk_rows, chunk_rows)
            x = x_ref[pl.ds(r0, chunk_rows), :].astype(jnp.float32)
            t = t_ref[pl.ds(r0, chunk_rows), :].astype(jnp.float32)
            x = jnp.clip(x, 0.0001, 0.9999)
            omx = 1.0 - x
            log_x = jnp.log(x)
            log_omx = jnp.log(omx)
            # gamma specialization keeps EUP transcendentals <= 4 per element.
            if gamma == 0.0:
                pow_omx = jnp.ones_like(x)
                pow_x = jnp.ones_like(x)
            elif gamma == 0.5:
                pow_omx = jnp.sqrt(omx)
                pow_x = jnp.sqrt(x)
            elif gamma == 1.0:
                pow_omx = omx
                pow_x = x
            elif gamma == 2.0:
                pow_omx = omx * omx
                pow_x = x * x
            else:
                pow_omx = jnp.exp(gamma * log_omx)
                pow_x = jnp.exp(gamma * log_x)
            loss = ((-alpha) * pow_omx * t * log_x
                    - (1.0 - alpha) * pow_x * (1.0 - t) * log_omx)
            if masked:
                # Tail mask — traced only for the final grid step.  Indices are
                # kept in ROW units (n // 128 fits int32 for any feasible n).
                base = i * block_rows + r0
                row_id = base + lax.broadcasted_iota(
                    jnp.int32, (chunk_rows, LANES), 0)
                keep = row_id < rows_valid
                if lane_rem:
                    lane_id = lax.broadcasted_iota(
                        jnp.int32, (chunk_rows, LANES), 1)
                    keep = keep | ((row_id == rows_valid) & (lane_id < lane_rem))
                loss = jnp.where(keep, loss, 0.0)
            if chunk_rows % SUBLANES == 0:
                # Pure-VPU fold into the vreg-shaped accumulator.
                acc_ref[...] += loss.reshape(
                    chunk_rows // SUBLANES, SUBLANES, LANES).sum(axis=0)
            else:
                # Tiny-input path (rows < 8): fold into sublane 0 only.
                row_sum = jnp.sum(loss, axis=0, keepdims=True)       # (1, 128)
                sub = lax.broadcasted_iota(jnp.int32, (SUBLANES, LANES), 0)
                acc_ref[...] += jnp.where(
                    sub == 0, jnp.broadcast_to(row_sum, (SUBLANES, LANES)), 0.0)
            return carry

        lax.fori_loop(0, num_chunks, chunk_body, 0)

    if not needs_mask:
        accumulate(masked=False)
    elif grid_blocks == 1:
        accumulate(masked=True)
    else:
        @pl.when(i < grid_blocks - 1)
        def _():
            accumulate(masked=False)

        @pl.when(i == grid_blocks - 1)
        def _():
            accumulate(masked=True)

    @pl.when(i == grid_blocks - 1)
    def _():
        # In-kernel final reduce (XLU is idle here) + mean/sum scaling: the
        # kernel emits the scalar, so no follow-up XLA reduce is needed.
        col = jnp.sum(acc_ref[...], axis=0, keepdims=True)     # (1, LANES)
        tot = jnp.sum(col, axis=1, keepdims=True)              # (1, 1)
        out_ref[...] = tot * scale


def bce_focal_loss(pred, target, *, gamma=0.5, alpha=0.5, reduction="mean"):
    """Pallas TPU implementation of BCEFocalLoss.forward (reduction in {'mean','sum'})."""
    assert pred.shape == target.shape
    assert reduction in ("mean", "sum")
    # TODO(synk): reduction='none' (elementwise loss output) not wired up here.
    n = int(pred.size)
    assert n > 0

    lane_rem = n % LANES
    rows_valid = n // LANES            # fully populated 128-lane rows

    # Keep native dtype in HBM (widened to f32 in-kernel).  The flatten +
    # (rows, 128) reshape is layout-compatible (bitcast), so the common
    # n % 128 == 0 case moves no data in the wrapper at all.
    flat_x = pred.reshape(-1)
    flat_t = target.reshape(-1)
    if lane_rem:
        # TODO(synk): replace this full-array pad for ragged n with a manual-DMA
        # tail path (memory_space=pl.ANY) to keep the wrapper copy-free.
        pad = LANES - lane_rem
        flat_x = jnp.pad(flat_x, (0, pad), constant_values=0.5)
        flat_t = jnp.pad(flat_t, (0, pad))
        rows = rows_valid + 1
    else:
        rows = rows_valid
    x2 = flat_x.reshape(rows, LANES)
    t2 = flat_t.reshape(rows, LANES)

    # Row tiling: block_rows = DMA granularity per grid step (multiple of the
    # inner chunk, never larger than the array), chunk_rows = in-kernel compute
    # granularity so elementwise intermediates stay near the vreg file.
    if rows >= CHUNK_ROWS:
        chunk_rows = CHUNK_ROWS
        max_block = (rows // CHUNK_ROWS) * CHUNK_ROWS
        nblocks_min = _cdiv(rows, MAX_BLOCK_ROWS)
        balanced = _round_up(_cdiv(rows, nblocks_min), CHUNK_ROWS)
        block_rows = min(MAX_BLOCK_ROWS, max_block, balanced)
    elif rows >= SUBLANES:
        block_rows = (rows // SUBLANES) * SUBLANES
        chunk_rows = block_rows
    else:
        block_rows = rows
        chunk_rows = rows
    grid_blocks = _cdiv(rows, block_rows)
    covered_rows = grid_blocks * block_rows
    needs_mask = (lane_rem != 0) or (covered_rows > rows_valid)

    scale = (1.0 / n) if reduction == "mean" else 1.0

    kernel = functools.partial(
        _focal_loss_kernel,
        gamma=float(gamma),
        alpha=float(alpha),
        scale=float(scale),
        block_rows=block_rows,
        chunk_rows=chunk_rows,
        grid_blocks=grid_blocks,
        rows_valid=rows_valid,
        lane_rem=lane_rem,
        needs_mask=needs_mask,
    )

    out = pl.pallas_call(
        kernel,
        out_shape=jax.ShapeDtypeStruct((1, 1), jnp.float32),
        grid_spec=pltpu.PrefetchScalarGridSpec(
            num_scalar_prefetch=0,
            grid=(grid_blocks,),
            in_specs=[
                pl.BlockSpec((block_rows, LANES), lambda i: (i, 0)),
                pl.BlockSpec((block_rows, LANES), lambda i: (i, 0)),
            ],
            out_specs=pl.BlockSpec((1, 1), lambda i: (0, 0)),
            scratch_shapes=[pltpu.VMEM((SUBLANES, LANES), jnp.float32)],
        ),
        compiler_params=pltpu.CompilerParams(
            # Single reduction axis; the scalar output block is resident across it.
            # TODO(synk): shard row-blocks across the two v7x TensorCores
            # (CORE_PARALLEL / core_map) once verified to change codegen.
            dimension_semantics=("arbitrary",),
            vmem_limit_bytes=VMEM_LIMIT_BYTES,
        ),
    )(x2, t2)

    return out[0, 0]


def bce_focal_loss_ref(pred, target, gamma=0.5, alpha=0.5, reduction="mean"):
    x = jnp.clip(pred.astype(jnp.float32), 0.0001, 0.9999)
    t = target.astype(jnp.float32)
    loss = (-alpha * (1 - x) ** gamma * t * jnp.log(x)
            - (1 - alpha) * x ** gamma * (1 - t) * jnp.log(1 - x))
    return jnp.mean(loss) if reduction == "mean" else jnp.sum(loss)


if __name__ == "__main__":
    key = jax.random.PRNGKey(0)
    k1, k2 = jax.random.split(key)
    # small NCHW-like shape: batch=2, channels=4, spatial=16x16
    shape = (2, 4, 16, 16)
    pred = jax.random.uniform(k1, shape, dtype=jnp.float32)              # probabilities
    target = (jax.random.uniform(k2, shape) > 0.5).astype(jnp.float32)   # binary labels

    out = bce_focal_loss(pred, target, gamma=0.5, alpha=0.5, reduction="mean")
    out = jax.block_until_ready(out)

    ref = bce_focal_loss_ref(pred, target)
    assert jnp.allclose(out, ref, rtol=1e-5, atol=1e-6), (out, ref)

    # also sanity-check 'sum' reduction
    out_s = jax.block_until_ready(bce_focal_loss(pred, target, reduction="sum"))
    ref_s = bce_focal_loss_ref(pred, target, reduction="sum")
    assert jnp.allclose(out_s, ref_s, rtol=1e-5, atol=1e-5), (out_s, ref_s)

    print("KERNEL_OK")
</pallas_src>

<mosaic_0001>
module attributes {stable_mosaic.version = 11 : i64} {
  func.func @_focal_loss_kernel(%arg0: i32, %arg1: memref<16x128xf32, #tpu.memory_space<vmem>>, %arg2: memref<16x128xf32, #tpu.memory_space<vmem>>, %arg3: memref<1x1xf32, #tpu.memory_space<vmem>>, %arg4: memref<8x128xf32, #tpu.memory_space<vmem>>) attributes {dimension_semantics = [#tpu.dimension_semantics<arbitrary>], iteration_bounds = array<i64: 1>, scalar_prefetch = 0 : i64, scratch_operands = 1 : i64, tpu.core_type = #tpu.core_type<tc>, window_params = [{transform_indices = @transform_0, window_bounds = array<i64: 16, 128>}, {transform_indices = @transform_1, window_bounds = array<i64: 16, 128>}, {pipeline_mode = #tpu.pipeline_mode<synchronous>, transform_indices = @transform_2, window_bounds = array<i64: 1, 1>}]} {
    %c0_i32 = arith.constant 0 : i32
    %0 = arith.cmpi eq, %arg0, %c0_i32 : i32
    %1 = arith.extui %0 : i1 to i32
    %c0_i32_0 = arith.constant 0 : i32
    %2 = arith.cmpi ne, %1, %c0_i32_0 : i32
    scf.if %2 {
      %cst_15 = arith.constant 0.000000e+00 : f32
      %38 = vector.broadcast %cst_15 : f32 to vector<8x128xf32>
      %c0_16 = arith.constant 0 : index
      %c0_17 = arith.constant 0 : index
      %39 = vector.load %arg4[%c0_16, %c0_17] : memref<8x128xf32, #tpu.memory_space<vmem>>, vector<8x128xf32>
      tpu.vector_store %arg4[%c0_16, %c0_17], %38 {strides = array<i32>} : memref<8x128xf32, #tpu.memory_space<vmem>>, vector<8x128xf32>,
    } else {
    }
    %c0_i32_1 = arith.constant 0 : i32
    %c16_i32 = arith.constant 16 : i32
    %3 = arith.muli %c0_i32_1, %c16_i32 : i32
    %4 = tpu.assume_multiple %3, 16 : i32
    %5 = arith.index_cast %4 : i32 to index
    %c0 = arith.constant 0 : index
    %6 = vector.load %arg1[%5, %c0] : memref<16x128xf32, #tpu.memory_space<vmem>>, vector<16x128xf32>
    %7 = arith.index_cast %4 : i32 to index
    %c0_2 = arith.constant 0 : index
    %8 = vector.load %arg2[%7, %c0_2] : memref<16x128xf32, #tpu.memory_space<vmem>>, vector<16x128xf32>
    %cst = arith.constant 9.99999974E-5 : f32
    %cst_3 = arith.constant 0.999899983 : f32
    %9 = vector.broadcast %cst : f32 to vector<16x128xf32>
    %10 = arith.maximumf %9, %6 : vector<16x128xf32>
    %11 = vector.broadcast %cst_3 : f32 to vector<16x128xf32>
    %12 = arith.minimumf %11, %10 : vector<16x128xf32>
    %cst_4 = arith.constant 1.000000e+00 : f32
    %13 = vector.broadcast %cst_4 : f32 to vector<16x128xf32>
    %14 = arith.subf %13, %12 : vector<16x128xf32>
    %15 = math.log %12 : vector<16x128xf32>
    %16 = math.log %14 : vector<16x128xf32>
    %17 = math.sqrt %14 : vector<16x128xf32>
    %18 = math.sqrt %12 : vector<16x128xf32>
    %cst_5 = arith.constant -5.000000e-01 : f32
    %19 = vector.broadcast %cst_5 : f32 to vector<16x128xf32>
    %20 = arith.mulf %19, %17 : vector<16x128xf32>
    %21 = arith.mulf %20, %8 : vector<16x128xf32>
    %22 = arith.mulf %21, %15 : vector<16x128xf32>
    %cst_6 = arith.constant 5.000000e-01 : f32
    %23 = vector.broadcast %cst_6 : f32 to vector<16x128xf32>
    %24 = arith.mulf %23, %18 : vector<16x128xf32>
    %cst_7 = arith.constant 1.000000e+00 : f32
    %25 = vector.broadcast %cst_7 : f32 to vector<16x128xf32>
    %26 = arith.subf %25, %8 : vector<16x128xf32>
    %27 = arith.mulf %24, %26 : vector<16x128xf32>
    %28 = arith.mulf %27, %16 : vector<16x128xf32>
    %29 = arith.subf %22, %28 : vector<16x128xf32>
    %c0_8 = arith.constant 0 : index
    %c0_9 = arith.constant 0 : index
    %30 = vector.load %arg4[%c0_8, %c0_9] : memref<8x128xf32, #tpu.memory_space<vmem>>, vector<8x128xf32>
    %31 = vector.shape_cast %29 : vector<16x128xf32> to vector<2x8x128xf32>
    %cst_10 = arith.constant dense<0.000000e+00> : vector<8x128xf32>
    %32 = vector.multi_reduction <add>, %31, %cst_10 [0] : vector<2x8x128xf32> to vector<8x128xf32>
    %33 = arith.addf %30, %32 : vector<8x128xf32>
    %c0_11 = arith.constant 0 : index
    %c0_12 = arith.constant 0 : index
    %34 = vector.load %arg4[%c0_11, %c0_12] : memref<8x128xf32, #tpu.memory_space<vmem>>, vector<8x128xf32>
    tpu.vector_store %arg4[%c0_11, %c0_12], %33 {strides = array<i32>} : memref<8x128xf32, #tpu.memory_space<vmem>>, vector<8x128xf32>,
    %c1_i32 = arith.constant 1 : i32
    %c0_i32_13 = arith.constant 0 : i32
    %35 = arith.cmpi eq, %arg0, %c0_i32_13 : i32
    %36 = arith.extui %35 : i1 to i32
    %c0_i32_14 = arith.constant 0 : i32
    %37 = arith.cmpi ne, %36, %c0_i32_14 : i32
    scf.if %37 {
      %c0_15 = arith.constant 0 : index
      %c0_16 = arith.constant 0 : index
      %38 = vector.load %arg4[%c0_15, %c0_16] : memref<8x128xf32, #tpu.memory_space<vmem>>, vector<8x128xf32>
      %cst_17 = arith.constant dense<0.000000e+00> : vector<128xf32>
      %39 = vector.multi_reduction <add>, %38, %cst_17 [0] : vector<8x128xf32> to vector<128xf32>
      %40 = vector.shape_cast %39 : vector<128xf32> to vector<1x128xf32>
      %cst_18 = arith.constant dense<0.000000e+00> : vector<1xf32>
      %41 = vector.multi_reduction <add>, %40, %cst_18 [1] : vector<1x128xf32> to vector<1xf32>
      %42 = vector.shape_cast %41 : vector<1xf32> to vector<1x1xf32>
      %cst_19 = arith.constant 4.8828125E-4 : f32
      %43 = vector.broadcast %cst_19 : f32 to vector<1x1xf32>
      %44 = arith.mulf %42, %43 : vector<1x1xf32>
      %c0_20 = arith.constant 0 : index
      %c0_21 = arith.constant 0 : index
      %45 = vector.load %arg3[%c0_20, %c0_21] : memref<1x1xf32, #tpu.memory_space<vmem>>, vector<1x1xf32>
      tpu.vector_store %arg3[%c0_20, %c0_21], %44 {strides = array<i32>} : memref<1x1xf32, #tpu.memory_space<vmem>>, vector<1x1xf32>,
    } else {
    }
    return
  }
  func.func @transform_0(%arg0: i32) -> (i32, i32) {
    %c0_i32 = arith.constant 0 : i32
    %c0_i32_0 = arith.constant 0 : i32
    return %arg0, %c0_i32 : i32, i32
  }
  func.func @transform_1(%arg0: i32) -> (i32, i32) {
    %c0_i32 = arith.constant 0 : i32
    %c0_i32_0 = arith.constant 0 : i32
    return %arg0, %c0_i32 : i32, i32
  }
  func.func @transform_2(%arg0: i32) -> (i32, i32) {
    %c0_i32 = arith.constant 0 : i32
    %c0_i32_0 = arith.constant 0 : i32
    %c0_i32_1 = arith.constant 0 : i32
    return %c0_i32, %c0_i32_0 : i32, i32
  }
}

</mosaic_0001>

<llo_original>
// kernel: tpu_custom_call.1
$region0: #{tpu_custom_call.1}
  #allocation0 [shape = 'u32[]', space=smem, size = 0x4, offset = 0x4, fixed_abs, tag = 'smem constant byte address 0x4 - core index']
  #allocation1 [shape = 'u32[72,128]{1,0:T(1,128)}', space=vmem, size = 0x9000, scoped, tag = 'internal scratch']
  #allocation2 [shape = 'f32[8,128]{1,0:T(8,128)}', space=vmem, size = 0x1000, scoped, tag = 'scratch operand']
  %s0 = inlined_call_operand.hbm [shape: f32[16,128], index: 0, kind: input, shape index: {}]
  %s1 = inlined_call_operand.hbm [shape: f32[16,128], index: 1, kind: input, shape index: {}]
  %s2 = inlined_call_operand.hbm [shape: f32[1,1], index: 2, kind: output, shape index: {}]
  %s3 = sld [smem:[#allocation0]]
  $region34: #{tpu_custom_call.1} parent=0
    _
  %s5 = ssub.s32 1, %s3
  %s6 = scalar_select 0, %s5, %s3
  $region1: #{tpu_custom_call.1} parent=0
    #allocation3 [shape = 'u8[8192]{0}', space=vmem, size = 0x2000, scoped, tag = 'input window, operand 0, single buffered']
    #allocation4 [shape = 's32[1]{0}', space=sflag, size = 0x4, scoped, tag = 'scoped memory for tpu_custom_call.1']
    #allocation5 [shape = 's32[1]{0}', space=sflag, size = 0x4, scoped, tag = 'scoped memory for tpu_custom_call.1']
    #allocation6 [shape = 'u8[8192]{0}', space=vmem, size = 0x2000, scoped, tag = 'input window, operand 1, single buffered']
    #allocation7 [shape = 's32[1]{0}', space=sflag, size = 0x4, scoped, tag = 'scoped memory for tpu_custom_call.1']
    #allocation8 [shape = 'u8[512]{0}', space=vmem, size = 0x400, scoped, tag = 'output window, operand 0, single buffered']
    %7 = vsyncpa [#allocation4], 0
    %8 = vsyncpa [#allocation7], 0
    %9 = vsyncpa [#allocation5], 0
    // Predicated region
    $region2: #{tpu_custom_call.1} parent=1 // pred_check
      _
    $region3: #{tpu_custom_call.1} parent=1 // pred_check_branch
      %11 = sbr.rel (0) target = $region5
    $region4: #{tpu_custom_call.1} parent=1 // pred_region
      %13 = vsyncadd [#allocation4], 0
      %s14 = sshll.u32 %s0, 4
      %s15 = int_to_ptr.hbm [resolvable:$true] %s14
      %s16 = sshll.u32 [#allocation3], 4
      %s17 = int_to_ptr.vmem [resolvable:$true] %s16
      %22 = dma.hbm_to_vmem [thread:$0]  %s15, 256, %s17, [#allocation4], 128, 128, 8
    $region5: #{tpu_custom_call.1} parent=1 // pred_fallthru
      _
    // Predicated region
    $region6: #{tpu_custom_call.1} parent=1 // pred_check
      _
    $region7: #{tpu_custom_call.1} parent=1 // pred_check_branch
      %24 = sbr.rel (0) target = $region9
    $region8: #{tpu_custom_call.1} parent=1 // pred_region
      %26 = vsyncadd [#allocation7], 0
      %s27 = sshll.u32 %s1, 4
      %s28 = int_to_ptr.hbm [resolvable:$true] %s27
      %s29 = sshll.u32 [#allocation6], 4
      %s30 = int_to_ptr.vmem [resolvable:$true] %s29
      %35 = dma.hbm_to_vmem [thread:$0]  %s28, 256, %s30, [#allocation7], 128, 128, 8
    $region9: #{tpu_custom_call.1} parent=1 // pred_fallthru
      _
    // Predicated region
    $region10: #{tpu_custom_call.1} parent=1 // pred_check
      _
    $region11: #{tpu_custom_call.1} parent=1 // pred_check_branch
      %37 = sbr.rel (0) target = $region13
    $region12: #{tpu_custom_call.1} parent=1 // pred_region
      %39 = dma.done [#allocation4], 256
    $region13: #{tpu_custom_call.1} parent=1 // pred_fallthru
      _
    // Predicated region
    $region14: #{tpu_custom_call.1} parent=1 // pred_check
      _
    $region15: #{tpu_custom_call.1} parent=1 // pred_check_branch
      %41 = sbr.rel (0) target = $region17
    $region16: #{tpu_custom_call.1} parent=1 // pred_region
      %43 = dma.done [#allocation7], 256
    $region17: #{tpu_custom_call.1} parent=1 // pred_fallthru
      _
    %p44 = scmp.eq.s32.totalorder 0, 0
    // Predicated region
    $region18: #{tpu_custom_call.1} parent=1 // pred_check
      %p45 = pneg %p44
    $region19: #{tpu_custom_call.1} parent=1 // pred_check_branch
      %47 = sbr.rel (%p45) target = $region21
    $region20: #{tpu_custom_call.1} parent=1 // pred_region
      %48 = vst [vmem:[#allocation2] sm:$0xff] 0.0
    $region21: #{tpu_custom_call.1} parent=1 // pred_fallthru
      _
    %v49 = vld [vmem:[#allocation3] sm:$0xff]
    %v50 = vld [vmem:[#allocation3 + $0x8] sm:$0xff]
    %v51 = vld [vmem:[#allocation6] sm:$0xff]
    %v52 = vld [vmem:[#allocation6 + $0x8] sm:$0xff]
    %v53 = vmax.f32 %v49, 0.0001
    %v54 = vmax.f32 %v50, 0.0001
    %v55 = vmin.f32 %v53, 0.9999
    %v56 = vmin.f32 %v54, 0.9999
    %v57 = vsub.f32 1.0, %v55
    %v58 = vsub.f32 1.0, %v56
    %v59 = vlog2.pop %v55
    %v60 = vmul.f32 %v59, 0.6931472
    %v61 = vlog2.pop %v56
    %v62 = vmul.f32 %v61, 0.6931472
    %v63 = vlog2.pop %v57
    %v64 = vmul.f32 %v63, 0.6931472
    %v65 = vlog2.pop %v58
    %v66 = vmul.f32 %v65, 0.6931472
    %v67 = vrsqrt.pop %v57
    %v68 = vmul.f32 %v67, %v57
    %v69 = vmul.f32 %v68, %v67
    %v70 = vmul.f32 0.5, %v69
    %v71 = vsub.f32 1.5, %v70
    %v72 = vmul.f32 %v67, %v71
    %v73 = vmul.f32 %v57, %v72
    %vm74 = vcmp.eq.f32.partialorder %v57, inf
    %v75 = vsel %vm74, %v57, %v73
    %vm76 = vcmp.eq.f32.partialorder %v57, 0.0
    %v77 = vand.u32 %v57, 2147483648
    %v78 = vsel %vm76, %v77, %v75
    %v79 = vrsqrt.pop %v58
    %v80 = vmul.f32 %v79, %v58
    %v81 = vmul.f32 %v80, %v79
    %v82 = vmul.f32 0.5, %v81
    %v83 = vsub.f32 1.5, %v82
    %v84 = vmul.f32 %v79, %v83
    %v85 = vmul.f32 %v58, %v84
    %vm86 = vcmp.eq.f32.partialorder %v58, inf
    %v87 = vsel %vm86, %v58, %v85
    %vm88 = vcmp.eq.f32.partialorder %v58, 0.0
    %v89 = vand.u32 %v58, 2147483648
    %v90 = vsel %vm88, %v89, %v87
    %v91 = vrsqrt.pop %v55
    %v92 = vmul.f32 %v91, %v55
    %v93 = vmul.f32 %v92, %v91
    %v94 = vmul.f32 0.5, %v93
    %v95 = vsub.f32 1.5, %v94
    %v96 = vmul.f32 %v91, %v95
    %v97 = vmul.f32 %v55, %v96
    %vm98 = vcmp.eq.f32.partialorder %v55, inf
    %v99 = vsel %vm98, %v55, %v97
    %vm100 = vcmp.eq.f32.partialorder %v55, 0.0
    %v101 = vand.u32 %v55, 2147483648
    %v102 = vsel %vm100, %v101, %v99
    %v103 = vrsqrt.pop %v56
    %v104 = vmul.f32 %v103, %v56
    %v105 = vmul.f32 %v104, %v103
    %v106 = vmul.f32 0.5, %v105
    %v107 = vsub.f32 1.5, %v106
    %v108 = vmul.f32 %v103, %v107
    %v109 = vmul.f32 %v56, %v108
    %vm110 = vcmp.eq.f32.partialorder %v56, inf
    %v111 = vsel %vm110, %v56, %v109
    %vm112 = vcmp.eq.f32.partialorder %v56, 0.0
    %v113 = vand.u32 %v56, 2147483648
    %v114 = vsel %vm112, %v113, %v111
    %v115 = vmul.f32 %v78, -0.5
    %v116 = vmul.f32 %v90, -0.5
    %v117 = vmul.f32 %v115, %v51
    %v118 = vmul.f32 %v116, %v52
    %v119 = vmul.f32 %v117, %v60
    %v120 = vmul.f32 %v118, %v62
    %v121 = vmul.f32 %v102, 0.5
    %v122 = vmul.f32 %v114, 0.5
    %v123 = vsub.f32 1.0, %v51
    %v124 = vsub.f32 1.0, %v52
    %v125 = vmul.f32 %v121, %v123
    %v126 = vmul.f32 %v122, %v124
    %v127 = vmul.f32 %v125, %v64
    %v128 = vmul.f32 %v126, %v66
    %v129 = vsub.f32 %v119, %v127
    %v130 = vsub.f32 %v120, %v128
    %v131 = vld [vmem:[#allocation2] sm:$0xff]
    %v132 = vadd.f32 %v129, %v130
    %v133 = vadd.f32 %v131, %v132
    %134 = vst [vmem:[#allocation2] sm:$0xff] %v133
    // Predicated region
    $region22: #{tpu_custom_call.1} parent=1 // pred_check
      %p135 = pneg %p44
    $region23: #{tpu_custom_call.1} parent=1 // pred_check_branch
      %137 = sbr.rel (%p135) target = $region25
    $region24: #{tpu_custom_call.1} parent=1 // pred_region
      %v138 = vld [vmem:[#allocation2] sm:$0xff]
      %v139 = vrot.slane %v138, 4
      %v140 = vadd.f32 %v138, %v139
      %v141 = vrot.slane %v140, 2
      %v142 = vadd.f32 %v140, %v141
      %v143 = vrot.slane %v142, 1
      %v144 = vadd.f32 %v142, %v143
      %145 = vadd.xlane.f32.xlu0 %v144
      %v146 = vpop.xlane.xlu0 %145
      %v147 = vmul.f32 %v146, 0.00048828125
      %vm148 = vcmask 0
      %149 = vst.msk [vmem:[#allocation8] sm:$0x1] %vm148, %v147
    $region25: #{tpu_custom_call.1} parent=1 // pred_fallthru
      _
    // Predicated region
    $region26: #{tpu_custom_call.1} parent=1 // pred_check
      _
    $region27: #{tpu_custom_call.1} parent=1 // pred_check_branch
      %151 = sbr.rel (0) target = $region29
    $region28: #{tpu_custom_call.1} parent=1 // pred_region
      %153 = vsyncadd [#allocation5], 0
      %s155 = sshll.u32 [#allocation8], 4
      %s156 = int_to_ptr.vmem [resolvable:$true] %s155
      %s157 = sshll.u32 %s2, 4
      %s158 = int_to_ptr.hbm [resolvable:$true] %s157
      %160 = dma.vmem_to_hbm [thread:$0]  %s156, 16, %s158, [#allocation5]
    $region29: #{tpu_custom_call.1} parent=1 // pred_fallthru
      _
    // Predicated region
    $region30: #{tpu_custom_call.1} parent=1 // pred_check
      _
    $region31: #{tpu_custom_call.1} parent=1 // pred_check_branch
      %162 = sbr.rel (0) target = $region33
    $region32: #{tpu_custom_call.1} parent=1 // pred_region
      %164 = dma.done [#allocation5], 16
    $region33: #{tpu_custom_call.1} parent=1 // pred_fallthru
      _
    %165 = vsyncpa [#allocation4], 1
    %166 = vsyncpa [#allocation7], 1
    %167 = vsyncpa [#allocation5], 1

</llo_original>
